<compile_context>
chip_gen: v7x
topology: tpu7x:2x2x1
jax: 0.10.0
libtpu: 0.0.40
codegen_flags: <defaults>
</compile_context>

<pallas_src>
import jax
import jax.numpy as jnp
from jax import lax
from jax.experimental import pallas as pl
from jax.experimental.pallas import tpu as pltpu


def _round_up(x: int, m: int) -> int:
    return ((x + m - 1) // m) * m


def critic_kernel(s_ref, a_ref, w1s_ref, w1a_ref, b1_ref, w2_ref, b2_ref,
                  w3m_ref, b3_ref, o_ref):
    # Layer 1: [state|action] @ W1 + b1, computed as two K-split MXU dots
    # (identical algebra to the concat), bf16 operands, f32 accumulation.
    h1 = jnp.dot(s_ref[...].astype(jnp.bfloat16), w1s_ref[...],
                 preferred_element_type=jnp.float32)
    h1 = h1 + jnp.dot(a_ref[...].astype(jnp.bfloat16), w1a_ref[...],
                      preferred_element_type=jnp.float32)
    h1 = jnp.maximum(h1 + b1_ref[...], 0.0)          # f32 VPU (v5e-safe)

    # Layer 2: (tb, H) @ (H, H)
    h2 = jnp.dot(h1.astype(jnp.bfloat16), w2_ref[...],
                 preferred_element_type=jnp.float32) + b2_ref[...]
    h2 = jnp.maximum(h2, 0.0)

    # Layer 3 with the mean over num_q folded into (w3m, b3m), produced
    # directly lane-dense:  out[0, b] = sum_h w3m[0, h] * h2[b, h]
    #   -> (1, tb) block, unmasked stores, no transpose/reshape needed.
    q = lax.dot_general(w3m_ref[...], h2.astype(jnp.bfloat16),
                        dimension_numbers=(((1,), (1,)), ((), ())),
                        preferred_element_type=jnp.float32)
    o_ref[...] = q + b3_ref[0]


def _pick_tile(b: int, tile_b: int, in1: int, hidden: int) -> int:
    """Batch tile: lane-aligned when grid > 1, bounded by a per-step VMEM budget."""
    def usage(t):
        # f32 h1/h2 + their bf16 casts dominate; plus double-buffered io blocks.
        return t * hidden * (4 + 4 + 2 + 2 + 2) + 2 * t * (in1 * 4 + 4)

    budget = 12 * 1024 * 1024   # well under v5e's 16 MiB default scoped VMEM

    small = _round_up(b, 16)    # bf16 sublane packing
    if b <= 256 and usage(small) <= budget:
        return small            # single tile == full (padded) batch

    # grid > 1: tiles must be multiples of 128 so the (1, tb) output block and
    # (tb, dim) input blocks satisfy the (8,128) constraint; also guarantees
    # >= 2 grid steps so the batch axis can split across v7x's 2 TensorCores.
    tb = max(128, _round_up(min(tile_b, (b + 1) // 2), 128))
    while tb > 128 and usage(tb) > budget:
        tb -= 128
    return tb


def critic_forward(state, action, kernel_params, tile_b: int = 512):
    """state: (B, state_dim), action: (B, action_dim) -> (B, 1) float32."""
    w1s, w1a, b1, w2, b2, w3m, b3m = kernel_params
    b, sd = state.shape
    ad = action.shape[1]
    hidden = w2.shape[0]
    in1 = sd + ad

    tb = _pick_tile(b, tile_b, in1, hidden)
    b_pad = _round_up(b, tb)
    if b_pad != b:
        state = jnp.pad(state, ((0, b_pad - b), (0, 0)))
        action = jnp.pad(action, ((0, b_pad - b), (0, 0)))
    grid = (b_pad // tb,)

    def resident(a):
        # Weights/biases stay VMEM-resident across grid steps (constant index map).
        return pl.BlockSpec(a.shape, lambda i: (0,) * a.ndim)

    flops = 2 * b_pad * (in1 * hidden + hidden * hidden + hidden)
    bytes_accessed = (b_pad * in1 * 4 + b_pad * 4            # activations in/out
                      + (in1 * hidden + hidden * hidden + hidden) * 2  # bf16 weights
                      + 2 * hidden * 4 + 4)                  # f32 biases + scalar

    out = pl.pallas_call(
        critic_kernel,
        out_shape=jax.ShapeDtypeStruct((1, b_pad), jnp.float32),
        grid=grid,
        in_specs=[
            pl.BlockSpec((tb, sd), lambda i: (i, 0)),   # state: tiled over batch
            pl.BlockSpec((tb, ad), lambda i: (i, 0)),   # action: tiled over batch
            resident(w1s), resident(w1a), resident(b1),
            resident(w2), resident(b2), resident(w3m),
            pl.BlockSpec(memory_space=pltpu.MemorySpace.SMEM),  # b3m scalar
        ],
        out_specs=pl.BlockSpec((1, tb), lambda i: (0, i)),      # lane-dense output
        compiler_params=pltpu.CompilerParams(
            dimension_semantics=("parallel",),
            vmem_limit_bytes=32 * 1024 * 1024),
        cost_estimate=pl.CostEstimate(
            flops=flops, transcendentals=0, bytes_accessed=bytes_accessed),
    )(state, action, w1s, w1a, b1, w2, b2, w3m, b3m)

    # (1, b_pad) -> (b, 1); row-major reshape preserves batch order.
    return out.reshape(b_pad, 1)[:b]


def init_params(key, state_dim, action_dim, hidden, num_q):
    """Deterministic synthetic init (PyTorch Linear-style); weights are (in, out), f32."""
    ks = jax.random.split(key, 6)
    in1 = state_dim + action_dim

    def lin(kw, kb, fan_in, fan_out):
        bound = 1.0 / jnp.sqrt(fan_in)
        w = jax.random.uniform(kw, (fan_in, fan_out), jnp.float32, -bound, bound)
        b = jax.random.uniform(kb, (1, fan_out), jnp.float32, -bound, bound)
        return w, b

    w1, b1 = lin(ks[0], ks[1], in1, hidden)
    w2, b2 = lin(ks[2], ks[3], hidden, hidden)
    w3, b3 = lin(ks[4], ks[5], hidden, num_q)
    return (w1, b1, w2, b2, w3, b3)


def prepare_params(params, state_dim):
    """K-split W1, fold the final mean into layer 3, cast MXU weights to bf16."""
    w1, b1, w2, b2, w3, b3 = params
    w1s = w1[:state_dim].astype(jnp.bfloat16)                 # (state_dim, H)
    w1a = w1[state_dim:].astype(jnp.bfloat16)                 # (action_dim, H)
    w3m = jnp.mean(w3, axis=1)[None, :].astype(jnp.bfloat16)  # (1, H) row vector
    b3m = jnp.mean(b3).reshape(1).astype(jnp.float32)         # (1,) SMEM scalar
    return (w1s, w1a, b1, w2.astype(jnp.bfloat16), b2, w3m, b3m)


def reference_forward(state, action, params):
    """Pure-JAX f32 reference matching the PyTorch module semantics."""
    w1, b1, w2, b2, w3, b3 = params
    x = jnp.concatenate([state, action], axis=1)
    h1 = jnp.maximum(x @ w1 + b1, 0.0)
    h2 = jnp.maximum(h1 @ w2 + b2, 0.0)
    q = h2 @ w3 + b3
    return jnp.mean(q, axis=-1, keepdims=True)


if __name__ == "__main__":
    state_dim, action_dim, hidden, num_q = 16, 8, 32, 8
    batch = 8

    key = jax.random.PRNGKey(0)
    k_s, k_a, k_p = jax.random.split(key, 3)
    state = jax.random.normal(k_s, (batch, state_dim), jnp.float32)
    action = jax.random.normal(k_a, (batch, action_dim), jnp.float32)

    params = init_params(k_p, state_dim, action_dim, hidden, num_q)
    kernel_params = prepare_params(params, state_dim)

    out = jax.block_until_ready(critic_forward(state, action, kernel_params))
    ref = reference_forward(state, action, params)

    assert out.shape == (batch, 1), out.shape
    # bf16 MXU operands (f32 accumulation) -> compare with a loosened tolerance.
    assert jnp.allclose(out, ref, atol=3e-2, rtol=3e-2), (out, ref)

    print("KERNEL_OK")
</pallas_src>

<mosaic_0001>
module attributes {stable_mosaic.version = 11 : i64} {
  func.func @critic_kernel(%arg0: i32, %arg1: memref<16x16xf32, #tpu.memory_space<vmem>>, %arg2: memref<16x8xf32, #tpu.memory_space<vmem>>, %arg3: memref<16x32xbf16, #tpu.memory_space<vmem>>, %arg4: memref<8x32xbf16, #tpu.memory_space<vmem>>, %arg5: memref<1x32xf32, #tpu.memory_space<vmem>>, %arg6: memref<32x32xbf16, #tpu.memory_space<vmem>>, %arg7: memref<1x32xf32, #tpu.memory_space<vmem>>, %arg8: memref<1x32xbf16, #tpu.memory_space<vmem>>, %arg9: memref<1xf32, #tpu.memory_space<smem>>, %arg10: memref<1x16xf32, #tpu.memory_space<vmem>>) attributes {dimension_semantics = [#tpu.dimension_semantics<parallel>], iteration_bounds = array<i64: 1>, scalar_prefetch = 0 : i64, scratch_operands = 0 : i64, tpu.core_type = #tpu.core_type<tc>, window_params = [{transform_indices = @transform_0, window_bounds = array<i64: 16, 16>}, {transform_indices = @transform_1, window_bounds = array<i64: 16, 8>}, {pipeline_mode = #tpu.pipeline_mode<synchronous>, transform_indices = @transform_2, window_bounds = array<i64: 16, 32>}, {pipeline_mode = #tpu.pipeline_mode<synchronous>, transform_indices = @transform_3, window_bounds = array<i64: 8, 32>}, {pipeline_mode = #tpu.pipeline_mode<synchronous>, transform_indices = @transform_4, window_bounds = array<i64: 1, 32>}, {pipeline_mode = #tpu.pipeline_mode<synchronous>, transform_indices = @transform_5, window_bounds = array<i64: 32, 32>}, {pipeline_mode = #tpu.pipeline_mode<synchronous>, transform_indices = @transform_6, window_bounds = array<i64: 1, 32>}, {pipeline_mode = #tpu.pipeline_mode<synchronous>, transform_indices = @transform_7, window_bounds = array<i64: 1, 32>}, {transform_indices = @transform_8, window_bounds = array<i64: 1>}, {transform_indices = @transform_9, window_bounds = array<i64: 1, 16>}]} {
    %c0 = arith.constant 0 : index
    %c0_0 = arith.constant 0 : index
    %0 = vector.load %arg1[%c0, %c0_0] : memref<16x16xf32, #tpu.memory_space<vmem>>, vector<16x16xf32>
    %1 = arith.truncf %0 : vector<16x16xf32> to vector<16x16xbf16>
    %c0_1 = arith.constant 0 : index
    %c0_2 = arith.constant 0 : index
    %2 = vector.load %arg3[%c0_1, %c0_2] : memref<16x32xbf16, #tpu.memory_space<vmem>>, vector<16x32xbf16>
    %cst = arith.constant dense<0.000000e+00> : vector<16x32xf32>
    %3 = tpu.matmul %1, %2, %cst {dimension_numbers = #tpu.dot_dimension_numbers<[1], [0], [0], [1], [0, 0, 1, 1], [], []>} : vector<16x16xbf16>, vector<16x32xbf16>, vector<16x32xf32> -> vector<16x32xf32>
    %c0_3 = arith.constant 0 : index
    %c0_4 = arith.constant 0 : index
    %4 = vector.load %arg2[%c0_3, %c0_4] : memref<16x8xf32, #tpu.memory_space<vmem>>, vector<16x8xf32>
    %5 = arith.truncf %4 : vector<16x8xf32> to vector<16x8xbf16>
    %c0_5 = arith.constant 0 : index
    %c0_6 = arith.constant 0 : index
    %6 = vector.load %arg4[%c0_5, %c0_6] : memref<8x32xbf16, #tpu.memory_space<vmem>>, vector<8x32xbf16>
    %cst_7 = arith.constant dense<0.000000e+00> : vector<16x32xf32>
    %7 = tpu.matmul %5, %6, %cst_7 {dimension_numbers = #tpu.dot_dimension_numbers<[1], [0], [0], [1], [0, 0, 1, 1], [], []>} : vector<16x8xbf16>, vector<8x32xbf16>, vector<16x32xf32> -> vector<16x32xf32>
    %8 = arith.addf %3, %7 : vector<16x32xf32>
    %c0_8 = arith.constant 0 : index
    %c0_9 = arith.constant 0 : index
    %9 = vector.load %arg5[%c0_8, %c0_9] : memref<1x32xf32, #tpu.memory_space<vmem>>, vector<1x32xf32>
    %10 = vector.broadcast %9 : vector<1x32xf32> to vector<16x32xf32>
    %11 = arith.addf %8, %10 : vector<16x32xf32>
    %cst_10 = arith.constant 0.000000e+00 : f32
    %12 = vector.broadcast %cst_10 : f32 to vector<16x32xf32>
    %13 = arith.maximumf %11, %12 : vector<16x32xf32>
    %14 = arith.truncf %13 : vector<16x32xf32> to vector<16x32xbf16>
    %c0_11 = arith.constant 0 : index
    %c0_12 = arith.constant 0 : index
    %15 = vector.load %arg6[%c0_11, %c0_12] : memref<32x32xbf16, #tpu.memory_space<vmem>>, vector<32x32xbf16>
    %cst_13 = arith.constant dense<0.000000e+00> : vector<16x32xf32>
    %16 = tpu.matmul %14, %15, %cst_13 {dimension_numbers = #tpu.dot_dimension_numbers<[1], [0], [0], [1], [0, 0, 1, 1], [], []>} : vector<16x32xbf16>, vector<32x32xbf16>, vector<16x32xf32> -> vector<16x32xf32>
    %c0_14 = arith.constant 0 : index
    %c0_15 = arith.constant 0 : index
    %17 = vector.load %arg7[%c0_14, %c0_15] : memref<1x32xf32, #tpu.memory_space<vmem>>, vector<1x32xf32>
    %18 = vector.broadcast %17 : vector<1x32xf32> to vector<16x32xf32>
    %19 = arith.addf %16, %18 : vector<16x32xf32>
    %cst_16 = arith.constant 0.000000e+00 : f32
    %20 = vector.broadcast %cst_16 : f32 to vector<16x32xf32>
    %21 = arith.maximumf %19, %20 : vector<16x32xf32>
    %c0_17 = arith.constant 0 : index
    %c0_18 = arith.constant 0 : index
    %22 = vector.load %arg8[%c0_17, %c0_18] : memref<1x32xbf16, #tpu.memory_space<vmem>>, vector<1x32xbf16>
    %23 = arith.truncf %21 : vector<16x32xf32> to vector<16x32xbf16>
    %cst_19 = arith.constant dense<0.000000e+00> : vector<1x16xf32>
    %24 = tpu.matmul %22, %23, %cst_19 {dimension_numbers = #tpu.dot_dimension_numbers<[1], [1], [0], [0], [0, 0, 1, 0], [], []>} : vector<1x32xbf16>, vector<16x32xbf16>, vector<1x16xf32> -> vector<1x16xf32>
    %c0_20 = arith.constant 0 : index
    %25 = memref.load %arg9[%c0_20] : memref<1xf32, #tpu.memory_space<smem>>
    %26 = vector.broadcast %25 : f32 to vector<1x16xf32>
    %27 = arith.addf %24, %26 : vector<1x16xf32>
    %c0_21 = arith.constant 0 : index
    %c0_22 = arith.constant 0 : index
    %28 = vector.load %arg10[%c0_21, %c0_22] : memref<1x16xf32, #tpu.memory_space<vmem>>, vector<1x16xf32>
    tpu.vector_store %arg10[%c0_21, %c0_22], %27 {strides = array<i32>} : memref<1x16xf32, #tpu.memory_space<vmem>>, vector<1x16xf32>,
    return
  }
  func.func @transform_0(%arg0: i32) -> (i32, i32) {
    %c0_i32 = arith.constant 0 : i32
    %c0_i32_0 = arith.constant 0 : i32
    return %arg0, %c0_i32 : i32, i32
  }
  func.func @transform_1(%arg0: i32) -> (i32, i32) {
    %c0_i32 = arith.constant 0 : i32
    %c0_i32_0 = arith.constant 0 : i32
    return %arg0, %c0_i32 : i32, i32
  }
  func.func @transform_2(%arg0: i32) -> (i32, i32) {
    %c0_i32 = arith.constant 0 : i32
    %c0_i32_0 = arith.constant 0 : i32
    %c0_i32_1 = arith.constant 0 : i32
    return %c0_i32, %c0_i32_0 : i32, i32
  }
  func.func @transform_3(%arg0: i32) -> (i32, i32) {
    %c0_i32 = arith.constant 0 : i32
    %c0_i32_0 = arith.constant 0 : i32
    %c0_i32_1 = arith.constant 0 : i32
    return %c0_i32, %c0_i32_0 : i32, i32
  }
  func.func @transform_4(%arg0: i32) -> (i32, i32) {
    %c0_i32 = arith.constant 0 : i32
    %c0_i32_0 = arith.constant 0 : i32
    %c0_i32_1 = arith.constant 0 : i32
    return %c0_i32, %c0_i32_0 : i32, i32
  }
  func.func @transform_5(%arg0: i32) -> (i32, i32) {
    %c0_i32 = arith.constant 0 : i32
    %c0_i32_0 = arith.constant 0 : i32
    %c0_i32_1 = arith.constant 0 : i32
    return %c0_i32, %c0_i32_0 : i32, i32
  }
  func.func @transform_6(%arg0: i32) -> (i32, i32) {
    %c0_i32 = arith.constant 0 : i32
    %c0_i32_0 = arith.constant 0 : i32
    %c0_i32_1 = arith.constant 0 : i32
    return %c0_i32, %c0_i32_0 : i32, i32
  }
  func.func @transform_7(%arg0: i32) -> (i32, i32) {
    %c0_i32 = arith.constant 0 : i32
    %c0_i32_0 = arith.constant 0 : i32
    %c0_i32_1 = arith.constant 0 : i32
    return %c0_i32, %c0_i32_0 : i32, i32
  }
  func.func @transform_8(%arg0: i32) -> i32 {
    %c0_i32 = arith.constant 0 : i32
    %c0_i32_0 = arith.constant 0 : i32
    return %c0_i32 : i32
  }
  func.func @transform_9(%arg0: i32) -> (i32, i32) {
    %c0_i32 = arith.constant 0 : i32
    %c0_i32_0 = arith.constant 0 : i32
    return %c0_i32, %arg0 : i32, i32
  }
}

</mosaic_0001>

<llo_original>
// kernel: tpu_custom_call.1
$region0: #{tpu_custom_call.1}
  #allocation0 [shape = 'u32[]', space=smem, size = 0x4, offset = 0x4, fixed_abs, tag = 'smem constant byte address 0x4 - core index']
  #allocation1 [shape = 'u32[144,128]{1,0:T(1,128)}', space=vmem, size = 0x12000, scoped, tag = 'internal scratch']
  #allocation2 [shape = 'f32[1]{0:T(128)S(6)}', space=smem, size = 0x200, scoped, tag = 'scoped memory for tpu_custom_call.1']
  %s0 = inlined_call_operand.vmem [shape: f32[16,16], index: 0, kind: input, shape index: {}]
  %s1 = inlined_call_operand.vmem [shape: f32[16,8], index: 1, kind: input, shape index: {}]
  %s2 = inlined_call_operand.hbm [shape: bf16[16,32], index: 2, kind: input, shape index: {}]
  %s3 = inlined_call_operand.vmem [shape: bf16[8,32], index: 3, kind: input, shape index: {}]
  %s4 = inlined_call_operand.vmem [shape: f32[1,32], index: 4, kind: input, shape index: {}]
  %s5 = inlined_call_operand.vmem [shape: bf16[32,32], index: 5, kind: input, shape index: {}]
  %s6 = inlined_call_operand.vmem [shape: f32[1,32], index: 6, kind: input, shape index: {}]
  %s7 = inlined_call_operand.vmem [shape: bf16[1,32], index: 7, kind: input, shape index: {}]
  %s8 = inlined_call_operand.<no memory space> [shape: f32[1], index: 8, kind: input, shape index: {}]
  %s9 = inlined_call_operand.hbm [shape: f32[1,16], index: 9, kind: output, shape index: {}]
  %s10 = sld [smem:[#allocation0]]
  $region50: #{tpu_custom_call.1} parent=0
    _
  %s12 = ssub.s32 1, %s10
  %s13 = scalar_select 0, %s12, %s10
  %14 = sst [smem:[#allocation2]] %s8
  $region1: #{tpu_custom_call.1} parent=0
    #allocation3 [shape = 'u8[4096]{0}', space=vmem, size = 0x1000, scoped, tag = 'input window, operand 2, single buffered']
    #allocation4 [shape = 's32[1]{0}', space=sflag, size = 0x4, scoped, tag = 'scoped memory for tpu_custom_call.1']
    #allocation5 [shape = 's32[1]{0}', space=sflag, size = 0x4, scoped, tag = 'scoped memory for tpu_custom_call.1']
    #allocation6 [shape = 'u8[512]{0}', space=vmem, size = 0x400, scoped, tag = 'output window, operand 0, single buffered']
    %15 = vsyncpa [#allocation4], 0
    %16 = vsyncpa [#allocation5], 0
    // Predicated region
    $region2: #{tpu_custom_call.1} parent=1 // pred_check
      _
    $region3: #{tpu_custom_call.1} parent=1 // pred_check_branch
      %18 = sbr.rel (0) target = $region5
    $region4: #{tpu_custom_call.1} parent=1 // pred_region
      _
    $region5: #{tpu_custom_call.1} parent=1 // pred_fallthru
      _
    // Predicated region
    $region6: #{tpu_custom_call.1} parent=1 // pred_check
      _
    $region7: #{tpu_custom_call.1} parent=1 // pred_check_branch
      %20 = sbr.rel (0) target = $region9
    $region8: #{tpu_custom_call.1} parent=1 // pred_region
      _
    $region9: #{tpu_custom_call.1} parent=1 // pred_fallthru
      _
    // Predicated region
    $region10: #{tpu_custom_call.1} parent=1 // pred_check
      _
    $region11: #{tpu_custom_call.1} parent=1 // pred_check_branch
      %22 = sbr.rel (0) target = $region13
    $region12: #{tpu_custom_call.1} parent=1 // pred_region
      %s24 = ssub.s32 128, 128
      %25 = vsyncadd [#allocation4], %s24
      %s26 = sshll.u32 [#allocation3], 4
      %s27 = int_to_ptr.vmem [resolvable:$true] %s26
      %32 = dma.hbm_to_vmem [thread:$0]  %s2, 128, %s27, [#allocation4], 64, 64, 4
    $region13: #{tpu_custom_call.1} parent=1 // pred_fallthru
      _
    // Predicated region
    $region14: #{tpu_custom_call.1} parent=1 // pred_check
      _
    $region15: #{tpu_custom_call.1} parent=1 // pred_check_branch
      %34 = sbr.rel (0) target = $region17
    $region16: #{tpu_custom_call.1} parent=1 // pred_region
      _
    $region17: #{tpu_custom_call.1} parent=1 // pred_fallthru
      _
    // Predicated region
    $region18: #{tpu_custom_call.1} parent=1 // pred_check
      _
    $region19: #{tpu_custom_call.1} parent=1 // pred_check_branch
      %36 = sbr.rel (0) target = $region21
    $region20: #{tpu_custom_call.1} parent=1 // pred_region
      _
    $region21: #{tpu_custom_call.1} parent=1 // pred_fallthru
      _
    // Predicated region
    $region22: #{tpu_custom_call.1} parent=1 // pred_check
      _
    $region23: #{tpu_custom_call.1} parent=1 // pred_check_branch
      %38 = sbr.rel (0) target = $region25
    $region24: #{tpu_custom_call.1} parent=1 // pred_region
      _
    $region25: #{tpu_custom_call.1} parent=1 // pred_fallthru
      _
    // Predicated region
    $region26: #{tpu_custom_call.1} parent=1 // pred_check
      _
    $region27: #{tpu_custom_call.1} parent=1 // pred_check_branch
      %40 = sbr.rel (0) target = $region29
    $region28: #{tpu_custom_call.1} parent=1 // pred_region
      _
    $region29: #{tpu_custom_call.1} parent=1 // pred_fallthru
      _
    // Predicated region
    $region30: #{tpu_custom_call.1} parent=1 // pred_check
      _
    $region31: #{tpu_custom_call.1} parent=1 // pred_check_branch
      %42 = sbr.rel (0) target = $region33
    $region32: #{tpu_custom_call.1} parent=1 // pred_region
      _
    $region33: #{tpu_custom_call.1} parent=1 // pred_fallthru
      _
    // Predicated region
    $region34: #{tpu_custom_call.1} parent=1 // pred_check
      _
    $region35: #{tpu_custom_call.1} parent=1 // pred_check_branch
      %44 = sbr.rel (0) target = $region37
    $region36: #{tpu_custom_call.1} parent=1 // pred_region
      _
    $region37: #{tpu_custom_call.1} parent=1 // pred_fallthru
      _
    // Predicated region
    $region38: #{tpu_custom_call.1} parent=1 // pred_check
      _
    $region39: #{tpu_custom_call.1} parent=1 // pred_check_branch
      %46 = sbr.rel (0) target = $region41
    $region40: #{tpu_custom_call.1} parent=1 // pred_region
      %47 = dma.done [#allocation4], 128
    $region41: #{tpu_custom_call.1} parent=1 // pred_fallthru
      _
    %v49 = vld [vmem:[%s0] sm:$0xff]
    %v50 = vld [vmem:[%s0 + $0x8] sm:$0xff]
    %v51 = vpack.c.bf16 %v50, %v49
    %v52 = vld [vmem:[#allocation3] sm:$0xf]
    %v53 = vld [vmem:[#allocation3 + $0x4] sm:$0xf]
    %v54 = vld [vmem:[%s1] sm:$0xff]
    %v55 = vld [vmem:[%s1 + $0x8] sm:$0xff]
    %v56 = vpack.c.bf16 %v55, %v54
    %v57 = vld [vmem:[%s3] sm:$0xf]
    %vm58 = vcmask 64512
    %v60 = vsel %vm58, %v56, 0
    %vm62 = vcmask 1043456
    %v64 = vsel %vm62, %v57, 0
    %66 = vmatprep.subr.bf16.mxu0 0
    %67 = vmatpush1.bf16.msra.mxu0 %v64
    %68 = vmatprep.subr.bf16.mxu0 0
    %69 = vmatpush1.bf16.msra.mxu0 0
    %70 = vmatprep.subr.bf16.mxu0 0
    %71 = vmatpush1.bf16.msra.mxu0 0
    %72 = vmatprep.subr.bf16.mxu0 0
    %73 = vmatpush1.bf16.msra.mxu0 0
    %74 = vmatprep.subr.bf16.mxu0 0
    %75 = vmatpush1.bf16.msra.mxu0 0
    %76 = vmatprep.subr.bf16.mxu0 0
    %77 = vmatpush1.bf16.msra.mxu0 0
    %78 = vmatprep.subr.bf16.mxu0 0
    %79 = vmatpush1.bf16.msra.mxu0 0
    %80 = vmatprep.subr.bf16.mxu0 0
    %81 = vmatpush1.bf16.msra.mxu0 0
    %82 = vmatprep.subr.bf16.mxu0 0
    %83 = vmatpush1.bf16.msra.mxu0 0
    %84 = vmatprep.subr.bf16.mxu0 0
    %85 = vmatpush1.bf16.msra.mxu0 0
    %86 = vmatprep.subr.bf16.mxu0 0
    %87 = vmatpush1.bf16.msra.mxu0 0
    %88 = vmatprep.subr.bf16.mxu0 0
    %89 = vmatpush1.bf16.msra.mxu0 0
    %90 = vmatprep.subr.bf16.mxu0 0
    %91 = vmatpush1.bf16.msra.mxu0 0
    %92 = vmatprep.subr.bf16.mxu0 0
    %93 = vmatpush1.bf16.msra.mxu0 0
    %94 = vmatprep.subr.bf16.mxu0 0
    %95 = vmatpush1.bf16.msra.mxu0 0
    %96 = vmatprep.subr.bf16.mxu0 0
    %97 = vmatpush1.bf16.msra.mxu0 0
    %98 = vmatprep.mubr.bf16.mxu0 0
    %99 = vmatmul.mubr.bf16.gmra.mrb[0].mxu0 %v60
    %v100 = vpop.f32.mrb[0].mxu0
    %v101 = vadd.f32 0.0, %v100
    %v102 = vpop.f32.mrb[0].mxu0
    %v103 = vpop.f32.mrb[0].mxu0
    %v104 = vadd.f32 0.0, %v103
    %v105 = vpop.f32.mrb[0].mxu0
    %106 = vdwg.mxu0
    %v109 = vunpack.c.l.b16 %v52
    %v110 = vunpack.c.l.b16 %v53
    %v111 = vpack.c.b16 %v110, %v109
    %vm113 = vcmask 130048
    %v115 = vsel %vm113, %v51, 0
    %117 = vmatprep.subr.bf16.mxu0 0
    %118 = vmatpush1.bf16.msra.mxu0 %v111
    %119 = vmatprep.subr.bf16.mxu0 0
    %120 = vmatpush1.bf16.msra.mxu0 0
    %121 = vmatprep.subr.bf16.mxu0 0
    %122 = vmatpush1.bf16.msra.mxu0 0
    %123 = vmatprep.subr.bf16.mxu0 0
    %124 = vmatpush1.bf16.msra.mxu0 0
    %125 = vmatprep.subr.bf16.mxu0 0
    %126 = vmatpush1.bf16.msra.mxu0 0
    %127 = vmatprep.subr.bf16.mxu0 0
    %128 = vmatpush1.bf16.msra.mxu0 0
    %129 = vmatprep.subr.bf16.mxu0 0
    %130 = vmatpush1.bf16.msra.mxu0 0
    %131 = vmatprep.subr.bf16.mxu0 0
    %132 = vmatpush1.bf16.msra.mxu0 0
    %133 = vmatprep.subr.bf16.mxu0 0
    %134 = vmatpush1.bf16.msra.mxu0 0
    %135 = vmatprep.subr.bf16.mxu0 0
    %136 = vmatpush1.bf16.msra.mxu0 0
    %137 = vmatprep.subr.bf16.mxu0 0
    %138 = vmatpush1.bf16.msra.mxu0 0
    %139 = vmatprep.subr.bf16.mxu0 0
    %140 = vmatpush1.bf16.msra.mxu0 0
    %141 = vmatprep.subr.bf16.mxu0 0
    %142 = vmatpush1.bf16.msra.mxu0 0
    %143 = vmatprep.subr.bf16.mxu0 0
    %144 = vmatpush1.bf16.msra.mxu0 0
    %145 = vmatprep.subr.bf16.mxu0 0
    %146 = vmatpush1.bf16.msra.mxu0 0
    %147 = vmatprep.subr.bf16.mxu0 0
    %148 = vmatpush1.bf16.msra.mxu0 0
    %149 = vmatprep.mubr.bf16.mxu0 0
    %150 = vmatmul.mubr.bf16.gmra.mrb[0].mxu0 %v115
    %v151 = vpop.f32.mrb[0].mxu0
    %v152 = vadd.f32 %v101, %v151
    %v153 = vpop.f32.mrb[0].mxu0
    %v154 = vpop.f32.mrb[0].mxu0
    %v155 = vadd.f32 %v104, %v154
    %v156 = vpop.f32.mrb[0].mxu0
    %157 = vdwg.mxu0
    %v158 = vld [vmem:[%s4] sm:$0x1]
    %v160 = vlaneseq
    %v161 = vshrl.u32 %v160, 7
    %v162 = vsub.s32 0, %v161
    %v163 = vrot.slane %v158, %v162
    %v165 = vadd.f32 %v152, %v163
    %v166 = vadd.f32 %v155, %v163
    %v167 = vmax.f32 %v165, 0.0
    %v168 = vmax.f32 %v166, 0.0
    %v169 = vpack.c.bf16 %v168, %v167
    %v170 = vld [vmem:[%s5] sm:$0xf]
    %v171 = vld [vmem:[%s5 + $0x4] sm:$0xf]
    %v172 = vld [vmem:[%s5 + $0x8] sm:$0xf]
    %v173 = vld [vmem:[%s5 + $0xc] sm:$0xf]
    %v174 = vld [vmem:[%s6] sm:$0x1]
    %v176 = vlaneseq
    %v177 = vshrl.u32 %v176, 7
    %v178 = vsub.s32 0, %v177
    %v179 = vrot.slane %v174, %v178
    %v185 = vunpack.c.l.b16 %v170
    %v186 = vunpack.c.l.b16 %v171
    %v187 = vunpack.c.l.b16 %v172
    %v188 = vunpack.c.l.b16 %v173
    %v189 = vpack.c.b16 %v186, %v185
    %v190 = vpack.c.b16 %v188, %v187
    %vm193 = vcmask 261120
    %v195 = vsel %vm193, %v169, 0
    %197 = vmatprep.subr.bf16.mxu0 0
    %198 = vmatpush1.bf16.msra.mxu0 %v189
    %199 = vmatprep.subr.bf16.mxu0 0
    %200 = vmatpush1.bf16.msra.mxu0 %v190
    %201 = vmatprep.subr.bf16.mxu0 0
    %202 = vmatpush1.bf16.msra.mxu0 0
    %203 = vmatprep.subr.bf16.mxu0 0
    %204 = vmatpush1.bf16.msra.mxu0 0
    %205 = vmatprep.subr.bf16.mxu0 0
    %206 = vmatpush1.bf16.msra.mxu0 0
    %207 = vmatprep.subr.bf16.mxu0 0
    %208 = vmatpush1.bf16.msra.mxu0 0
    %209 = vmatprep.subr.bf16.mxu0 0
    %210 = vmatpush1.bf16.msra.mxu0 0
    %211 = vmatprep.subr.bf16.mxu0 0
    %212 = vmatpush1.bf16.msra.mxu0 0
    %213 = vmatprep.subr.bf16.mxu0 0
    %214 = vmatpush1.bf16.msra.mxu0 0
    %215 = vmatprep.subr.bf16.mxu0 0
    %216 = vmatpush1.bf16.msra.mxu0 0
    %217 = vmatprep.subr.bf16.mxu0 0
    %218 = vmatpush1.bf16.msra.mxu0 0
    %219 = vmatprep.subr.bf16.mxu0 0
    %220 = vmatpush1.bf16.msra.mxu0 0
    %221 = vmatprep.subr.bf16.mxu0 0
    %222 = vmatpush1.bf16.msra.mxu0 0
    %223 = vmatprep.subr.bf16.mxu0 0
    %224 = vmatpush1.bf16.msra.mxu0 0
    %225 = vmatprep.subr.bf16.mxu0 0
    %226 = vmatpush1.bf16.msra.mxu0 0
    %227 = vmatprep.subr.bf16.mxu0 0
    %228 = vmatpush1.bf16.msra.mxu0 0
    %229 = vmatprep.mubr.bf16.mxu0 0
    %230 = vmatmul.mubr.bf16.gmra.mrb[0].mxu0 %v195
    %v231 = vpop.f32.mrb[0].mxu0
    %v232 = vadd.f32 %v179, %v231
    %v233 = vpop.f32.mrb[0].mxu0
    %v234 = vpop.f32.mrb[0].mxu0
    %v235 = vadd.f32 %v179, %v234
    %v236 = vpop.f32.mrb[0].mxu0
    %237 = vdwg.mxu0
    %v238 = vmax.f32 %v232, 0.0
    %v239 = vmax.f32 %v235, 0.0
    %v240 = vld [vmem:[%s7] sm:$0x1]
    %v241 = vpack.c.bf16 %v239, %v238
    %s242 = sld [smem:[#allocation2]]
    %v243 = vstv %s242
    %v245 = vsel %vm193, %v240, 0
    %v248 = vsel %vm193, %v241, 0
    %250 = vmatprep.subr.bf16.mxu0 0
    %251 = vmatpush1.bf16.xpose.msra.mxu0 %v248
    %252 = vmatprep.subr.bf16.mxu0 0
    %253 = vmatpush1.bf16.xpose.msra.mxu0 0
    %254 = vmatprep.subr.bf16.mxu0 0
    %255 = vmatpush1.bf16.xpose.msra.mxu0 0
    %256 = vmatprep.subr.bf16.mxu0 0
    %257 = vmatpush1.bf16.xpose.msra.mxu0 0
    %258 = vmatprep.subr.bf16.mxu0 0
    %259 = vmatpush1.bf16.xpose.msra.mxu0 0
    %260 = vmatprep.subr.bf16.mxu0 0
    %261 = vmatpush1.bf16.xpose.msra.mxu0 0
    %262 = vmatprep.subr.bf16.mxu0 0
    %263 = vmatpush1.bf16.xpose.msra.mxu0 0
    %264 = vmatprep.subr.bf16.mxu0 0
    %265 = vmatpush1.bf16.xpose.msra.mxu0 0
    %266 = vmatprep.subr.bf16.mxu0 0
    %267 = vmatpush1.bf16.xpose.msra.mxu0 0
    %268 = vmatprep.subr.bf16.mxu0 0
    %269 = vmatpush1.bf16.xpose.msra.mxu0 0
    %270 = vmatprep.subr.bf16.mxu0 0
    %271 = vmatpush1.bf16.xpose.msra.mxu0 0
    %272 = vmatprep.subr.bf16.mxu0 0
    %273 = vmatpush1.bf16.xpose.msra.mxu0 0
    %274 = vmatprep.subr.bf16.mxu0 0
    %275 = vmatpush1.bf16.xpose.msra.mxu0 0
    %276 = vmatprep.subr.bf16.mxu0 0
    %277 = vmatpush1.bf16.xpose.msra.mxu0 0
    %278 = vmatprep.subr.bf16.mxu0 0
    %279 = vmatpush1.bf16.xpose.msra.mxu0 0
    %280 = vmatprep.subr.bf16.mxu0 0
    %281 = vmatpush1.bf16.xpose.msra.mxu0 0
    %282 = vmatprep.mubr.bf16.mxu0 0
    %283 = vmatmul.mubr.bf16.gmra.mrb[0].mxu0 %v245
    %v284 = vpop.f32.mrb[0].mxu0
    %v285 = vadd.f32 %v243, %v284
    %v286 = vpop.f32.mrb[0].mxu0
    %v287 = vpop.f32.mrb[0].mxu0
    %v288 = vpop.f32.mrb[0].mxu0
    %289 = vdwg.mxu0
    %vm290 = vcmask 122880
    %291 = vst.msk [vmem:[#allocation6] sm:$0x1] %vm290, %v285
    // Predicated region
    $region42: #{tpu_custom_call.1} parent=1 // pred_check
      _
    $region43: #{tpu_custom_call.1} parent=1 // pred_check_branch
      %293 = sbr.rel (0) target = $region45
    $region44: #{tpu_custom_call.1} parent=1 // pred_region
      %s295 = ssub.s32 16, 16
      %296 = vsyncadd [#allocation5], %s295
      %s298 = sshll.u32 [#allocation6], 4
      %s299 = int_to_ptr.vmem [resolvable:$true] %s298
      %301 = dma.vmem_to_hbm [thread:$0]  %s299, 16, %s9, [#allocation5]
    $region45: #{tpu_custom_call.1} parent=1 // pred_fallthru
      _
    // Predicated region
    $region46: #{tpu_custom_call.1} parent=1 // pred_check
      _
    $region47: #{tpu_custom_call.1} parent=1 // pred_check_branch
      %303 = sbr.rel (0) target = $region49
    $region48: #{tpu_custom_call.1} parent=1 // pred_region
      %304 = dma.done [#allocation5], 16
    $region49: #{tpu_custom_call.1} parent=1 // pred_fallthru
      _
    %305 = vsyncpa [#allocation4], 1
    %306 = vsyncpa [#allocation5], 1

</llo_original>
